<compile_context>
chip_gen: v6e
topology: v6e:2x2x1
jax: 0.10.0
libtpu: 0.0.40
codegen_flags: <defaults>
</compile_context>

<pallas_src>
import math

import jax
import jax.numpy as jnp
from jax.experimental import pallas as pl
from jax.experimental.pallas import tpu as pltpu


def _round_up(x, m):
    return ((x + m - 1) // m) * m


# ---------------------------------------------------------------------------
# Kernel 1: support = x @ W^T + b  (tiny, hoisted out of the propagation loop)
# ---------------------------------------------------------------------------
def linear_kernel(x_ref, wt_ref, b_ref, o_ref):
    sup = jnp.dot(x_ref[...], wt_ref[...], preferred_element_type=jnp.float32)
    sup = sup + b_ref[...]  # bias broadcasts over rows
    o_ref[...] = sup.astype(o_ref.dtype)


# ---------------------------------------------------------------------------
# Kernel 2: out = relu(adj @ support), tiled over (row tiles, k reduction)
# ---------------------------------------------------------------------------
def propagate_kernel(adj_ref, sup_ref, o_ref, acc_ref):
    k = pl.program_id(1)

    @pl.when(k == 0)
    def _init():
        acc_ref[...] = jnp.zeros_like(acc_ref)

    acc_ref[...] += jnp.dot(
        adj_ref[...], sup_ref[...], preferred_element_type=jnp.float32
    )

    @pl.when(k == pl.num_programs(1) - 1)
    def _finalize():
        # ReLU only on the finalized accumulator (not per k-step).
        o_ref[...] = jnp.maximum(acc_ref[...], 0.0).astype(o_ref.dtype)


# ---------------------------------------------------------------------------
# Wrapper
# ---------------------------------------------------------------------------
def gcn_layer(x, weight, bias, adj, *, tm=256, tk=512):
    """x: [N, F_in], weight: [F_out, F_in] (PyTorch layout), bias: [F_out],
    adj: [N, N]. Returns relu(adj @ (x @ W^T + b)) as float32 [N, F_out]."""
    N, f_in = x.shape
    f_out = weight.shape[0]
    assert adj.shape == (N, N)

    # Lane-dense padding for MXU / unmasked stores.
    f_in_p = _round_up(f_in, 128)
    f_out_p = _round_up(f_out, 128)

    # Clamp tiles to the (padded) problem, keep them 128-aligned.
    tm = min(tm, _round_up(N, 128))
    tk = min(tk, _round_up(N, 128))
    n_p = _round_up(N, math.lcm(tm, tk))

    # Zero-padded operands (zeros in padded adj cols kill padded support rows).
    x_p = jnp.zeros((n_p, f_in_p), jnp.float32).at[:N, :f_in].set(
        x.astype(jnp.float32))
    wt_p = jnp.zeros((f_in_p, f_out_p), jnp.float32).at[:f_in, :f_out].set(
        weight.T.astype(jnp.float32))
    b_p = jnp.zeros((1, f_out_p), jnp.float32).at[0, :f_out].set(
        bias.astype(jnp.float32))
    adj_p = jnp.zeros((n_p, n_p), jnp.bfloat16).at[:N, :N].set(
        adj.astype(jnp.bfloat16))

    # --- 1) linear: support = x @ W^T + b ------------------------------------
    tml = min(256, n_p)
    support = pl.pallas_call(
        linear_kernel,
        out_shape=jax.ShapeDtypeStruct((n_p, f_out_p), jnp.bfloat16),
        grid_spec=pltpu.PrefetchScalarGridSpec(
            num_scalar_prefetch=0,
            grid=(n_p // tml,),
            in_specs=[
                pl.BlockSpec((tml, f_in_p), lambda i: (i, 0)),
                pl.BlockSpec((f_in_p, f_out_p), lambda i: (0, 0)),
                pl.BlockSpec((1, f_out_p), lambda i: (0, 0)),
            ],
            out_specs=pl.BlockSpec((tml, f_out_p), lambda i: (i, 0)),
        ),
        compiler_params=pltpu.CompilerParams(
            dimension_semantics=("parallel",),
        ),
    )(x_p, wt_p, b_p)

    # --- 2) propagation: out = relu(adj @ support) ---------------------------
    grid = (n_p // tm, n_p // tk)
    cost = pl.CostEstimate(
        flops=2 * n_p * n_p * f_out_p,
        transcendentals=0,
        bytes_accessed=2 * n_p * n_p            # bf16 adj
        + 2 * n_p * f_out_p                     # bf16 support (re-read per row tile)
        + 4 * n_p * f_out_p,                    # f32 output
    )
    out_p = pl.pallas_call(
        propagate_kernel,
        out_shape=jax.ShapeDtypeStruct((n_p, f_out_p), jnp.float32),
        grid_spec=pltpu.PrefetchScalarGridSpec(
            num_scalar_prefetch=0,
            grid=grid,
            in_specs=[
                pl.BlockSpec((tm, tk), lambda i, k: (i, k)),        # adj tile
                pl.BlockSpec((tk, f_out_p), lambda i, k: (k, 0)),   # support tile
            ],
            out_specs=pl.BlockSpec((tm, f_out_p), lambda i, k: (i, 0)),
            scratch_shapes=[pltpu.VMEM((tm, f_out_p), jnp.float32)],
        ),
        compiler_params=pltpu.CompilerParams(
            # row-tile axis "parallel" (shards across v7x's 2 TCs; free on
            # v5e/v6e), reduction axis "arbitrary" (accumulator resident).
            dimension_semantics=("parallel", "arbitrary"),
            vmem_limit_bytes=32 * 1024 * 1024,
        ),
        cost_estimate=cost,
    )(adj_p, support)

    # Strip padding.
    return out_p[:N, :f_out]

    # TODO(synk): for genuinely sparse adjacencies, scalar-prefetch a per-row-tile
    # list of nonzero column blocks (PrefetchScalarGridSpec) to skip empty tk tiles.


# ---------------------------------------------------------------------------
# Self-test
# ---------------------------------------------------------------------------
def _ref(x, weight, bias, adj):
    return jnp.maximum(adj @ (x @ weight.T + bias), 0.0)


def _make_inputs(key, N, f_in, f_out):
    k_x, k_adj, k_w, k_b = jax.random.split(key, 4)
    x = jax.random.normal(k_x, (N, f_in), dtype=jnp.float32)

    # symmetric, row-normalized adjacency (typical GCN input)
    a = (jax.random.uniform(k_adj, (N, N)) > 0.5).astype(jnp.float32)
    a = jnp.maximum(a, a.T) + jnp.eye(N, dtype=jnp.float32)
    adj = a / jnp.sum(a, axis=1, keepdims=True)

    bound = 1.0 / (f_in ** 0.5)
    weight = jax.random.uniform(k_w, (f_out, f_in), minval=-bound, maxval=bound,
                                dtype=jnp.float32)
    bias = jax.random.uniform(k_b, (f_out,), minval=-bound, maxval=bound,
                              dtype=jnp.float32)
    return x, weight, bias, adj


if __name__ == "__main__":
    key = jax.random.PRNGKey(0)
    k1, k2 = jax.random.split(key, 2)

    # Small case (single tile).
    x, w, b, adj = _make_inputs(k1, N=16, f_in=8, f_out=32)
    out = jax.block_until_ready(gcn_layer(x, w, b, adj))
    ref = _ref(x, w, b, adj)
    assert out.shape == (16, 32)
    assert jnp.allclose(out, ref, atol=3e-2, rtol=3e-2), "small-case mismatch"

    # Slightly larger case: exercises multi-tile grid, k-accumulation, padding.
    x2, w2, b2, adj2 = _make_inputs(k2, N=300, f_in=8, f_out=32)
    out2 = jax.block_until_ready(gcn_layer(x2, w2, b2, adj2))
    ref2 = _ref(x2, w2, b2, adj2)
    assert out2.shape == (300, 32)
    assert jnp.allclose(out2, ref2, atol=3e-2, rtol=3e-2), "tiled-case mismatch"

    print("KERNEL_OK")
</pallas_src>

<mosaic_0001>
module attributes {stable_mosaic.version = 11 : i64} {
  func.func @linear_kernel(%arg0: i32, %arg1: memref<128x128xf32, #tpu.memory_space<vmem>>, %arg2: memref<128x128xf32, #tpu.memory_space<vmem>>, %arg3: memref<1x128xf32, #tpu.memory_space<vmem>>, %arg4: memref<128x128xbf16, #tpu.memory_space<vmem>>) attributes {dimension_semantics = [#tpu.dimension_semantics<parallel>], iteration_bounds = array<i64: 1>, scalar_prefetch = 0 : i64, scratch_operands = 0 : i64, tpu.core_type = #tpu.core_type<tc>, window_params = [{transform_indices = @transform_0, window_bounds = array<i64: 128, 128>}, {pipeline_mode = #tpu.pipeline_mode<synchronous>, transform_indices = @transform_1, window_bounds = array<i64: 128, 128>}, {pipeline_mode = #tpu.pipeline_mode<synchronous>, transform_indices = @transform_2, window_bounds = array<i64: 1, 128>}, {transform_indices = @transform_3, window_bounds = array<i64: 128, 128>}]} {
    %c0 = arith.constant 0 : index
    %c0_0 = arith.constant 0 : index
    %0 = vector.load %arg1[%c0, %c0_0] : memref<128x128xf32, #tpu.memory_space<vmem>>, vector<128x128xf32>
    %c0_1 = arith.constant 0 : index
    %c0_2 = arith.constant 0 : index
    %1 = vector.load %arg2[%c0_1, %c0_2] : memref<128x128xf32, #tpu.memory_space<vmem>>, vector<128x128xf32>
    %cst = arith.constant dense<0.000000e+00> : vector<128x128xf32>
    %2 = tpu.matmul %0, %1, %cst {dimension_numbers = #tpu.dot_dimension_numbers<[1], [0], [0], [1], [0, 0, 1, 1], [], []>} : vector<128x128xf32>, vector<128x128xf32>, vector<128x128xf32> -> vector<128x128xf32>
    %c0_3 = arith.constant 0 : index
    %c0_4 = arith.constant 0 : index
    %3 = vector.load %arg3[%c0_3, %c0_4] : memref<1x128xf32, #tpu.memory_space<vmem>>, vector<1x128xf32>
    %4 = vector.broadcast %3 : vector<1x128xf32> to vector<128x128xf32>
    %5 = arith.addf %2, %4 : vector<128x128xf32>
    %6 = arith.truncf %5 : vector<128x128xf32> to vector<128x128xbf16>
    %c0_5 = arith.constant 0 : index
    %c0_6 = arith.constant 0 : index
    %7 = vector.load %arg4[%c0_5, %c0_6] : memref<128x128xbf16, #tpu.memory_space<vmem>>, vector<128x128xbf16>
    tpu.vector_store %arg4[%c0_5, %c0_6], %6 {strides = array<i32>} : memref<128x128xbf16, #tpu.memory_space<vmem>>, vector<128x128xbf16>,
    return
  }
  func.func @transform_0(%arg0: i32) -> (i32, i32) {
    %c0_i32 = arith.constant 0 : i32
    %c0_i32_0 = arith.constant 0 : i32
    return %arg0, %c0_i32 : i32, i32
  }
  func.func @transform_1(%arg0: i32) -> (i32, i32) {
    %c0_i32 = arith.constant 0 : i32
    %c0_i32_0 = arith.constant 0 : i32
    %c0_i32_1 = arith.constant 0 : i32
    return %c0_i32, %c0_i32_0 : i32, i32
  }
  func.func @transform_2(%arg0: i32) -> (i32, i32) {
    %c0_i32 = arith.constant 0 : i32
    %c0_i32_0 = arith.constant 0 : i32
    %c0_i32_1 = arith.constant 0 : i32
    return %c0_i32, %c0_i32_0 : i32, i32
  }
  func.func @transform_3(%arg0: i32) -> (i32, i32) {
    %c0_i32 = arith.constant 0 : i32
    %c0_i32_0 = arith.constant 0 : i32
    return %arg0, %c0_i32 : i32, i32
  }
}

</mosaic_0001>

<llo_original>
// kernel: tpu_custom_call.1
$region0: #{tpu_custom_call.1}
  #allocation0 [shape = 'u32[]', space=smem, size = 0x4, offset = 0x4, fixed_abs, tag = 'smem constant byte address 0x4 - core index']
  #allocation1 [shape = 'u32[144,128]{1,0:T(1,128)}', space=vmem, size = 0x12000, scoped, tag = 'internal scratch']
  %s0 = inlined_call_operand.hbm [shape: f32[128,128], index: 0, kind: input, shape index: {}]
  %s1 = inlined_call_operand.hbm [shape: f32[128,128], index: 1, kind: input, shape index: {}]
  %s2 = inlined_call_operand.vmem [shape: f32[1,128], index: 2, kind: input, shape index: {}]
  %s3 = inlined_call_operand.hbm [shape: bf16[128,128], index: 3, kind: output, shape index: {}]
  %s4 = sld [smem:[#allocation0]]
  $region30: #{tpu_custom_call.1} parent=0
    _
  %s6 = ssub.s32 1, %s4
  %s7 = scalar_select 0, %s6, %s4
  $region1: #{tpu_custom_call.1} parent=0
    #allocation2 [shape = 'u8[65536]{0}', space=vmem, size = 0x10000, scoped, tag = 'input window, operand 0, single buffered']
    #allocation3 [shape = 's32[1]{0}', space=sflag, size = 0x4, scoped, tag = 'scoped memory for tpu_custom_call.1']
    #allocation4 [shape = 's32[1]{0}', space=sflag, size = 0x4, scoped, tag = 'scoped memory for tpu_custom_call.1']
    #allocation5 [shape = 'u8[65536]{0}', space=vmem, size = 0x10000, scoped, tag = 'input window, operand 1, single buffered']
    #allocation6 [shape = 's32[1]{0}', space=sflag, size = 0x4, scoped, tag = 'scoped memory for tpu_custom_call.1']
    #allocation7 [shape = 'u8[32768]{0}', space=vmem, size = 0x8000, scoped, tag = 'output window, operand 0, single buffered']
    %8 = vsyncpa [#allocation3], 0
    %9 = vsyncpa [#allocation6], 0
    %10 = vsyncpa [#allocation4], 0
    // Predicated region
    $region2: #{tpu_custom_call.1} parent=1 // pred_check
      _
    $region3: #{tpu_custom_call.1} parent=1 // pred_check_branch
      %12 = sbr.rel (0) target = $region5
    $region4: #{tpu_custom_call.1} parent=1 // pred_region
      %s14 = ssub.s32 2048, 2048
      %15 = vsyncadd [#allocation3], %s14
      %s16 = sshll.u32 [#allocation2], 4
      %s17 = int_to_ptr.vmem [resolvable:$true] %s16
      %22 = dma.hbm_to_vmem [thread:$0]  %s0, 2048, %s17, [#allocation3], 128, 128, 8
    $region5: #{tpu_custom_call.1} parent=1 // pred_fallthru
      _
    // Predicated region
    $region6: #{tpu_custom_call.1} parent=1 // pred_check
      _
    $region7: #{tpu_custom_call.1} parent=1 // pred_check_branch
      %24 = sbr.rel (0) target = $region9
    $region8: #{tpu_custom_call.1} parent=1 // pred_region
      %s26 = ssub.s32 2048, 2048
      %27 = vsyncadd [#allocation6], %s26
      %s28 = sshll.u32 [#allocation5], 4
      %s29 = int_to_ptr.vmem [resolvable:$true] %s28
      %34 = dma.hbm_to_vmem [thread:$0]  %s1, 2048, %s29, [#allocation6], 128, 128, 8
    $region9: #{tpu_custom_call.1} parent=1 // pred_fallthru
      _
    // Predicated region
    $region10: #{tpu_custom_call.1} parent=1 // pred_check
      _
    $region11: #{tpu_custom_call.1} parent=1 // pred_check_branch
      %36 = sbr.rel (0) target = $region13
    $region12: #{tpu_custom_call.1} parent=1 // pred_region
      _
    $region13: #{tpu_custom_call.1} parent=1 // pred_fallthru
      _
    // Predicated region
    $region14: #{tpu_custom_call.1} parent=1 // pred_check
      _
    $region15: #{tpu_custom_call.1} parent=1 // pred_check_branch
      %38 = sbr.rel (0) target = $region17
    $region16: #{tpu_custom_call.1} parent=1 // pred_region
      %39 = dma.done [#allocation3], 2048
    $region17: #{tpu_custom_call.1} parent=1 // pred_fallthru
      _
    // Predicated region
    $region18: #{tpu_custom_call.1} parent=1 // pred_check
      _
    $region19: #{tpu_custom_call.1} parent=1 // pred_check_branch
      %41 = sbr.rel (0) target = $region21
    $region20: #{tpu_custom_call.1} parent=1 // pred_region
      %42 = dma.done [#allocation6], 2048
    $region21: #{tpu_custom_call.1} parent=1 // pred_fallthru
      _
    %v43 = vld [vmem:[#allocation2] sm:$0xff]
    %v44 = vld [vmem:[#allocation2 + $0x8] sm:$0xff]
    %v45 = vld [vmem:[#allocation2 + $0x10] sm:$0xff]
    %v46 = vld [vmem:[#allocation2 + $0x18] sm:$0xff]
    %v47 = vld [vmem:[#allocation2 + $0x20] sm:$0xff]
    %v48 = vld [vmem:[#allocation2 + $0x28] sm:$0xff]
    %v49 = vld [vmem:[#allocation2 + $0x30] sm:$0xff]
    %v50 = vld [vmem:[#allocation2 + $0x38] sm:$0xff]
    %v51 = vld [vmem:[#allocation2 + $0x40] sm:$0xff]
    %v52 = vld [vmem:[#allocation2 + $0x48] sm:$0xff]
    %v53 = vld [vmem:[#allocation2 + $0x50] sm:$0xff]
    %v54 = vld [vmem:[#allocation2 + $0x58] sm:$0xff]
    %v55 = vld [vmem:[#allocation2 + $0x60] sm:$0xff]
    %v56 = vld [vmem:[#allocation2 + $0x68] sm:$0xff]
    %v57 = vld [vmem:[#allocation2 + $0x70] sm:$0xff]
    %v58 = vld [vmem:[#allocation2 + $0x78] sm:$0xff]
    %v59 = vld [vmem:[#allocation5] sm:$0xff]
    %v60 = vld [vmem:[#allocation5 + $0x8] sm:$0xff]
    %v61 = vld [vmem:[#allocation5 + $0x10] sm:$0xff]
    %v62 = vld [vmem:[#allocation5 + $0x18] sm:$0xff]
    %v63 = vld [vmem:[#allocation5 + $0x20] sm:$0xff]
    %v64 = vld [vmem:[#allocation5 + $0x28] sm:$0xff]
    %v65 = vld [vmem:[#allocation5 + $0x30] sm:$0xff]
    %v66 = vld [vmem:[#allocation5 + $0x38] sm:$0xff]
    %v67 = vld [vmem:[#allocation5 + $0x40] sm:$0xff]
    %v68 = vld [vmem:[#allocation5 + $0x48] sm:$0xff]
    %v69 = vld [vmem:[#allocation5 + $0x50] sm:$0xff]
    %v70 = vld [vmem:[#allocation5 + $0x58] sm:$0xff]
    %v71 = vld [vmem:[#allocation5 + $0x60] sm:$0xff]
    %v72 = vld [vmem:[#allocation5 + $0x68] sm:$0xff]
    %v73 = vld [vmem:[#allocation5 + $0x70] sm:$0xff]
    %v74 = vld [vmem:[#allocation5 + $0x78] sm:$0xff]
    %v75 = vld [vmem:[%s2] sm:$0x1]
    %v77 = vlaneseq
    %v78 = vshrl.u32 %v77, 7
    %v79 = vsub.s32 0, %v78
    %v80 = vrot.slane %v75, %v79
    %82 = vmatprep.subr.mxu0 0.0
    %83 = vmatpush1.msra.mxu0 %v74
    %84 = vmatprep.subr.mxu0 0.0
    %85 = vmatpush1.msra.mxu0 %v73
    %86 = vmatprep.subr.mxu0 0.0
    %87 = vmatpush1.msra.mxu0 %v72
    %88 = vmatprep.subr.mxu0 0.0
    %89 = vmatpush1.msra.mxu0 %v71
    %90 = vmatprep.subr.mxu0 0.0
    %91 = vmatpush1.msra.mxu0 %v70
    %92 = vmatprep.subr.mxu0 0.0
    %93 = vmatpush1.msra.mxu0 %v69
    %94 = vmatprep.subr.mxu0 0.0
    %95 = vmatpush1.msra.mxu0 %v68
    %96 = vmatprep.subr.mxu0 0.0
    %97 = vmatpush1.msra.mxu0 %v67
    %98 = vmatprep.subr.mxu0 0.0
    %99 = vmatpush1.msra.mxu0 %v66
    %100 = vmatprep.subr.mxu0 0.0
    %101 = vmatpush1.msra.mxu0 %v65
    %102 = vmatprep.subr.mxu0 0.0
    %103 = vmatpush1.msra.mxu0 %v64
    %104 = vmatprep.subr.mxu0 0.0
    %105 = vmatpush1.msra.mxu0 %v63
    %106 = vmatprep.subr.mxu0 0.0
    %107 = vmatpush1.msra.mxu0 %v62
    %108 = vmatprep.subr.mxu0 0.0
    %109 = vmatpush1.msra.mxu0 %v61
    %110 = vmatprep.subr.mxu0 0.0
    %111 = vmatpush1.msra.mxu0 %v60
    %112 = vmatprep.subr.mxu0 0.0
    %113 = vmatpush1.msra.mxu0 %v59
    %114 = vmatprep.subr.mxu0 0.0
    %115 = vmatpush2.msra.mxu0 0.0
    %116 = vmatprep.subr.mxu0 0.0
    %117 = vmatpush2.msra.mxu0 0.0
    %118 = vmatprep.subr.mxu0 0.0
    %119 = vmatpush2.msra.mxu0 0.0
    %120 = vmatprep.subr.mxu0 0.0
    %121 = vmatpush2.msra.mxu0 0.0
    %122 = vmatprep.subr.mxu0 0.0
    %123 = vmatpush2.msra.mxu0 0.0
    %124 = vmatprep.subr.mxu0 0.0
    %125 = vmatpush2.msra.mxu0 0.0
    %126 = vmatprep.subr.mxu0 0.0
    %127 = vmatpush2.msra.mxu0 0.0
    %128 = vmatprep.subr.mxu0 0.0
    %129 = vmatpush2.msra.mxu0 0.0
    %130 = vmatprep.subr.mxu0 0.0
    %131 = vmatpush2.msra.mxu0 0.0
    %132 = vmatprep.subr.mxu0 0.0
    %133 = vmatpush2.msra.mxu0 0.0
    %134 = vmatprep.subr.mxu0 0.0
    %135 = vmatpush2.msra.mxu0 0.0
    %136 = vmatprep.subr.mxu0 0.0
    %137 = vmatpush2.msra.mxu0 0.0
    %138 = vmatprep.subr.mxu0 0.0
    %139 = vmatpush2.msra.mxu0 0.0
    %140 = vmatprep.subr.mxu0 0.0
    %141 = vmatpush2.msra.mxu0 0.0
    %142 = vmatprep.subr.mxu0 0.0
    %143 = vmatpush2.msra.mxu0 0.0
    %144 = vmatprep.subr.mxu0 0.0
    %145 = vmatpush2.msra.mxu0 0.0
    %146 = vmatprep.mubr.f32.mxu0 0.0
    %147 = vmatmul.mubr.f32.gmra.mxu0 %v43
    %v148 = vpop.f32.mrf.mxu0
    %v149 = vadd.f32 %v80, %v148
    %v150 = vpop.f32.mrf.mxu0
    %151 = vmatprep.mubr.f32.mxu0 0.0
    %152 = vmatmul.mubr.f32.gmra.mxu0 %v44
    %v153 = vpop.f32.mrf.mxu0
    %v154 = vadd.f32 %v80, %v153
    %v155 = vpop.f32.mrf.mxu0
    %156 = vmatprep.mubr.f32.mxu0 0.0
    %157 = vmatmul.mubr.f32.gmra.mxu0 %v45
    %v158 = vpop.f32.mrf.mxu0
    %v159 = vadd.f32 %v80, %v158
    %v160 = vpop.f32.mrf.mxu0
    %161 = vmatprep.mubr.f32.mxu0 0.0
    %162 = vmatmul.mubr.f32.gmra.mxu0 %v46
    %v163 = vpop.f32.mrf.mxu0
    %v164 = vadd.f32 %v80, %v163
    %v165 = vpop.f32.mrf.mxu0
    %166 = vmatprep.mubr.f32.mxu0 0.0
    %167 = vmatmul.mubr.f32.gmra.mxu0 %v47
    %v168 = vpop.f32.mrf.mxu0
    %v169 = vadd.f32 %v80, %v168
    %v170 = vpop.f32.mrf.mxu0
    %171 = vmatprep.mubr.f32.mxu0 0.0
    %172 = vmatmul.mubr.f32.gmra.mxu0 %v48
    %v173 = vpop.f32.mrf.mxu0
    %v174 = vadd.f32 %v80, %v173
    %v175 = vpop.f32.mrf.mxu0
    %176 = vmatprep.mubr.f32.mxu0 0.0
    %177 = vmatmul.mubr.f32.gmra.mxu0 %v49
    %v178 = vpop.f32.mrf.mxu0
    %v179 = vadd.f32 %v80, %v178
    %v180 = vpop.f32.mrf.mxu0
    %181 = vmatprep.mubr.f32.mxu0 0.0
    %182 = vmatmul.mubr.f32.gmra.mxu0 %v50
    %v183 = vpop.f32.mrf.mxu0
    %v184 = vadd.f32 %v80, %v183
    %v185 = vpop.f32.mrf.mxu0
    %186 = vmatprep.mubr.f32.mxu0 0.0
    %187 = vmatmul.mubr.f32.gmra.mxu0 %v51
    %v188 = vpop.f32.mrf.mxu0
    %v189 = vadd.f32 %v80, %v188
    %v190 = vpop.f32.mrf.mxu0
    %191 = vmatprep.mubr.f32.mxu0 0.0
    %192 = vmatmul.mubr.f32.gmra.mxu0 %v52
    %v193 = vpop.f32.mrf.mxu0
    %v194 = vadd.f32 %v80, %v193
    %v195 = vpop.f32.mrf.mxu0
    %196 = vmatprep.mubr.f32.mxu0 0.0
    %197 = vmatmul.mubr.f32.gmra.mxu0 %v53
    %v198 = vpop.f32.mrf.mxu0
    %v199 = vadd.f32 %v80, %v198
    %v200 = vpop.f32.mrf.mxu0
    %201 = vmatprep.mubr.f32.mxu0 0.0
    %202 = vmatmul.mubr.f32.gmra.mxu0 %v54
    %v203 = vpop.f32.mrf.mxu0
    %v204 = vadd.f32 %v80, %v203
    %v205 = vpop.f32.mrf.mxu0
    %206 = vmatprep.mubr.f32.mxu0 0.0
    %207 = vmatmul.mubr.f32.gmra.mxu0 %v55
    %v208 = vpop.f32.mrf.mxu0
    %v209 = vadd.f32 %v80, %v208
    %v210 = vpop.f32.mrf.mxu0
    %211 = vmatprep.mubr.f32.mxu0 0.0
    %212 = vmatmul.mubr.f32.gmra.mxu0 %v56
    %v213 = vpop.f32.mrf.mxu0
    %v214 = vadd.f32 %v80, %v213
    %v215 = vpop.f32.mrf.mxu0
    %216 = vmatprep.mubr.f32.mxu0 0.0
    %217 = vmatmul.mubr.f32.gmra.mxu0 %v57
    %v218 = vpop.f32.mrf.mxu0
    %v219 = vadd.f32 %v80, %v218
    %v220 = vpop.f32.mrf.mxu0
    %221 = vmatprep.mubr.f32.mxu0 0.0
    %222 = vmatmul.mubr.f32.gmra.mxu0 %v58
    %v223 = vpop.f32.mrf.mxu0
    %v224 = vadd.f32 %v80, %v223
    %v225 = vpop.f32.mrf.mxu0
    %226 = vdwg.mxu0
    %v227 = vpack.c.bf16 %v154, %v149
    %v228 = vpack.c.bf16 %v164, %v159
    %v229 = vpack.c.bf16 %v174, %v169
    %v230 = vpack.c.bf16 %v184, %v179
    %v231 = vpack.c.bf16 %v194, %v189
    %v232 = vpack.c.bf16 %v204, %v199
    %v233 = vpack.c.bf16 %v214, %v209
    %v234 = vpack.c.bf16 %v224, %v219
    %v243 = vunpack.c.l.b16 %v227
    %v244 = vunpack.c.h.b16 %v227
    %v245 = vunpack.c.l.b16 %v228
    %v246 = vunpack.c.h.b16 %v228
    %v247 = vunpack.c.l.b16 %v229
    %v248 = vunpack.c.h.b16 %v229
    %v249 = vunpack.c.l.b16 %v230
    %v250 = vunpack.c.h.b16 %v230
    %v251 = vunpack.c.l.b16 %v231
    %v252 = vunpack.c.h.b16 %v231
    %v253 = vunpack.c.l.b16 %v232
    %v254 = vunpack.c.h.b16 %v232
    %v255 = vunpack.c.l.b16 %v233
    %v256 = vunpack.c.h.b16 %v233
    %v257 = vunpack.c.l.b16 %v234
    %v258 = vunpack.c.h.b16 %v234
    %v259 = vpack.c.b16 %v243, %v243
    %v260 = vpack.c.b16 %v244, %v244
    %v261 = vpack.c.b16 %v245, %v245
    %v262 = vpack.c.b16 %v246, %v246
    %v263 = vpack.c.b16 %v247, %v247
    %v264 = vpack.c.b16 %v248, %v248
    %v265 = vpack.c.b16 %v249, %v249
    %v266 = vpack.c.b16 %v250, %v250
    %v267 = vpack.c.b16 %v251, %v251
    %v268 = vpack.c.b16 %v252, %v252
    %v269 = vpack.c.b16 %v253, %v253
    %v270 = vpack.c.b16 %v254, %v254
    %v271 = vpack.c.b16 %v255, %v255
    %v272 = vpack.c.b16 %v256, %v256
    %v273 = vpack.c.b16 %v257, %v257
    %v274 = vpack.c.b16 %v258, %v258
    %291 = vst [vmem:[#allocation7] sm:$0xf] %v259
    %292 = vst [vmem:[#allocation7 + $0x4] sm:$0xf] %v260
    %293 = vst [vmem:[#allocation7 + $0x8] sm:$0xf] %v261
    %294 = vst [vmem:[#allocation7 + $0xc] sm:$0xf] %v262
    %295 = vst [vmem:[#allocation7 + $0x10] sm:$0xf] %v263
    %296 = vst [vmem:[#allocation7 + $0x14] sm:$0xf] %v264
    %297 = vst [vmem:[#allocation7 + $0x18] sm:$0xf] %v265
    %298 = vst [vmem:[#allocation7 + $0x1c] sm:$0xf] %v266
    %299 = vst [vmem:[#allocation7 + $0x20] sm:$0xf] %v267
    %300 = vst [vmem:[#allocation7 + $0x24] sm:$0xf] %v268
    %301 = vst [vmem:[#allocation7 + $0x28] sm:$0xf] %v269
    %302 = vst [vmem:[#allocation7 + $0x2c] sm:$0xf] %v270
    %303 = vst [vmem:[#allocation7 + $0x30] sm:$0xf] %v271
    %304 = vst [vmem:[#allocation7 + $0x34] sm:$0xf] %v272
    %305 = vst [vmem:[#allocation7 + $0x38] sm:$0xf] %v273
    %306 = vst [vmem:[#allocation7 + $0x3c] sm:$0xf] %v274
    // Predicated region
    $region22: #{tpu_custom_call.1} parent=1 // pred_check
      _
    $region23: #{tpu_custom_call.1} parent=1 // pred_check_branch
      %308 = sbr.rel (0) target = $region25
    $region24: #{tpu_custom_call.1} parent=1 // pred_region
      %s310 = ssub.s32 1024, 1024
      %311 = vsyncadd [#allocation4], %s310
      %s312 = sshll.u32 [#allocation7], 4
      %s313 = int_to_ptr.vmem [resolvable:$true] %s312
      %318 = dma.vmem_to_hbm [thread:$0]  %s313, 1024, %s3, [#allocation4], 64, 64, 4
    $region25: #{tpu_custom_call.1} parent=1 // pred_fallthru
      _
    // Predicated region
    $region26: #{tpu_custom_call.1} parent=1 // pred_check
      _
    $region27: #{tpu_custom_call.1} parent=1 // pred_check_branch
      %320 = sbr.rel (0) target = $region29
    $region28: #{tpu_custom_call.1} parent=1 // pred_region
      %321 = dma.done [#allocation4], 1024
    $region29: #{tpu_custom_call.1} parent=1 // pred_fallthru
      _
    %322 = vsyncpa [#allocation3], 1
    %323 = vsyncpa [#allocation6], 1
    %324 = vsyncpa [#allocation4], 1

</llo_original>
